<compile_context>
chip_gen: v7x
topology: tpu7x:2x2x1
jax: 0.10.0
libtpu: 0.0.40
codegen_flags: <defaults>
</compile_context>

<pallas_src>
import functools

import jax
import jax.numpy as jnp
from jax import lax
from jax.experimental import pallas as pl
from jax.experimental.pallas import tpu as pltpu


def _round_up(a, b):
    return ((a + b - 1) // b) * b


def _elbo_nll_kernel(logits_ref, targets_ref, out_ref, *,
                     n_valid, tile_n, tiles_per_shard):
    s = pl.program_id(0)          # shard axis ("parallel", v7x megacore split)
    t = pl.program_id(1)          # tile-within-shard axis ("arbitrary" reduction)

    @pl.when(t == 0)
    def _():
        out_ref[...] = jnp.zeros_like(out_ref)

    x = logits_ref[...].astype(jnp.float32)                    # (TILE_N, C), f32 compute
    tn, c = x.shape

    # Numerically stable log-sum-exp along the class (lane) axis, keepdims throughout.
    m = jnp.max(x, axis=1, keepdims=True)                      # (TILE_N, 1)
    lse = m + jnp.log(jnp.sum(jnp.exp(x - m), axis=1, keepdims=True))

    # Fused one-hot gather: x[row, target[row]] without materializing log-softmax or a
    # separate f32 one-hot array.
    col_ids = lax.broadcasted_iota(jnp.int32, (tn, c), 1)
    picked = jnp.sum(jnp.where(col_ids == targets_ref[...], x, 0.0),
                     axis=1, keepdims=True)                     # (TILE_N, 1)

    per_row_nll = lse - picked                                  # = -log_softmax(x)[target]

    # Mask rows that only exist because N was padded up to the tile grid.
    row_ids = ((s * tiles_per_shard + t) * tile_n
               + lax.broadcasted_iota(jnp.int32, (tn, 1), 0))
    per_row_nll = jnp.where(row_ids < n_valid, per_row_nll, 0.0)

    # Accumulate the partial sum into the resident (1, 1, 1) output block.
    partial = jnp.sum(per_row_nll, axis=0, keepdims=True)       # (1, 1)
    out_ref[...] += partial.reshape(out_ref.shape)


def elbo_loss(logits, aux_targets, kl_divergence, kl_weight=1.0, *, tile_n=None):
    """ELBO = nll_loss(log_softmax(logits, dim=1), aux_targets) + kl_weight * kl_divergence.

    logits: (N, C) float (f32 or bf16); aux_targets: (N,) int; kl_divergence: scalar.
    """
    # TODO(synk): PyTorch F.nll_loss defaults to ignore_index=-100; that path is not
    #             replicated here (all N rows contribute and the mean divides by N).
    n, c = logits.shape
    itemsize = jnp.dtype(logits.dtype).itemsize

    if tile_n is None:
        # Keep 2 pipeline buffers of the logits tile within a conservative VMEM budget
        # (safe for v5e's 16 MiB scoped default and v7x's 64 MiB physical VMEM).
        budget = 12 * 1024 * 1024
        tile_cap = max(8, (budget // (2 * c * itemsize)) // 8 * 8)
        tile_n = int(min(512, tile_cap, _round_up(n, 8)))
    tile_n = int(_round_up(tile_n, 8))

    total_tiles = pl.cdiv(n, tile_n)
    num_shards = 2 if total_tiles >= 2 else 1      # v7x: one shard per TensorCore
    tiles_per_shard = pl.cdiv(total_tiles, num_shards)
    n_pad = num_shards * tiles_per_shard * tile_n

    targets = aux_targets.astype(jnp.int32).reshape(n, 1)
    if n_pad != n:
        logits = jnp.pad(logits, ((0, n_pad - n), (0, 0)))
        targets = jnp.pad(targets, ((0, n_pad - n), (0, 0)))

    kernel = functools.partial(_elbo_nll_kernel, n_valid=n, tile_n=tile_n,
                               tiles_per_shard=tiles_per_shard)

    partials = pl.pallas_call(
        kernel,
        out_shape=jax.ShapeDtypeStruct((num_shards, 1, 1), jnp.float32),
        grid_spec=pltpu.PrefetchScalarGridSpec(
            num_scalar_prefetch=0,
            grid=(num_shards, tiles_per_shard),
            in_specs=[
                pl.BlockSpec((tile_n, c), lambda s, t: (s * tiles_per_shard + t, 0)),
                pl.BlockSpec((tile_n, 1), lambda s, t: (s * tiles_per_shard + t, 0)),
            ],
            out_specs=pl.BlockSpec((1, 1, 1), lambda s, t: (s, 0, 0)),
        ),
        compiler_params=pltpu.CompilerParams(
            dimension_semantics=("parallel", "arbitrary"),
            vmem_limit_bytes=32 * 1024 * 1024,
        ),
    )(logits, targets)

    nll = jnp.sum(partials) / jnp.float32(n)
    return nll + jnp.float32(kl_weight) * jnp.asarray(kl_divergence, jnp.float32)


def _reference(logits, aux_targets, kl_divergence, kl_weight):
    logp = jax.nn.log_softmax(logits.astype(jnp.float32), axis=1)
    nll = -jnp.mean(logp[jnp.arange(logits.shape[0]), aux_targets])
    return nll + kl_weight * jnp.asarray(kl_divergence, jnp.float32)


if __name__ == "__main__":
    key = jax.random.PRNGKey(0)
    k1, k2, k3, k4, k5 = jax.random.split(key, 5)

    # Small example consistent with the module: (N, C) logits, (N,) class targets, scalar KL.
    N, C = 8, 32
    kl_weight = 0.5
    logits = jax.random.normal(k1, (N, C), dtype=jnp.float32)
    aux_targets = jax.random.randint(k2, (N,), 0, C, dtype=jnp.int32)
    kl_divergence = jax.random.uniform(k3, (), dtype=jnp.float32)

    loss = jax.block_until_ready(elbo_loss(logits, aux_targets, kl_divergence, kl_weight))
    ref = _reference(logits, aux_targets, kl_divergence, kl_weight)
    assert jnp.allclose(loss, ref, atol=1e-5, rtol=1e-5), (loss, ref)

    # Second check: exercise the multi-tile / 2-shard / row-padding path (forced tile_n=8).
    N2 = 44
    logits2 = jax.random.normal(k4, (N2, C), dtype=jnp.float32)
    targets2 = jax.random.randint(k5, (N2,), 0, C, dtype=jnp.int32)
    loss2 = jax.block_until_ready(
        elbo_loss(logits2, targets2, kl_divergence, kl_weight, tile_n=8))
    ref2 = _reference(logits2, targets2, kl_divergence, kl_weight)
    assert jnp.allclose(loss2, ref2, atol=1e-5, rtol=1e-5), (loss2, ref2)

    # Third check: bf16 logits path (f32 compute inside the kernel).
    logits3 = logits2.astype(jnp.bfloat16)
    loss3 = jax.block_until_ready(
        elbo_loss(logits3, targets2, kl_divergence, kl_weight))
    ref3 = _reference(logits3, targets2, kl_divergence, kl_weight)
    assert jnp.allclose(loss3, ref3, atol=2e-2, rtol=2e-2), (loss3, ref3)

    print("KERNEL_OK")
</pallas_src>

<mosaic_0001>
module attributes {stable_mosaic.version = 11 : i64} {
  func.func @_elbo_nll_kernel(%arg0: i32, %arg1: i32, %arg2: memref<8x32xf32, #tpu.memory_space<vmem>>, %arg3: memref<8x1xi32, #tpu.memory_space<vmem>>, %arg4: memref<1x1x1xf32, #tpu.memory_space<vmem>>) attributes {dimension_semantics = [#tpu.dimension_semantics<parallel>, #tpu.dimension_semantics<arbitrary>], iteration_bounds = array<i64: 1, 1>, scalar_prefetch = 0 : i64, scratch_operands = 0 : i64, tpu.core_type = #tpu.core_type<tc>, window_params = [{transform_indices = @transform_0, window_bounds = array<i64: 8, 32>}, {transform_indices = @transform_1, window_bounds = array<i64: 8, 1>}, {transform_indices = @transform_2, window_bounds = array<i64: 1, 1, 1>}]} {
    %c0_i32 = arith.constant 0 : i32
    %0 = arith.cmpi eq, %arg1, %c0_i32 : i32
    %1 = arith.extui %0 : i1 to i32
    %c0_i32_0 = arith.constant 0 : i32
    %2 = arith.cmpi ne, %1, %c0_i32_0 : i32
    scf.if %2 {
      %cst_16 = arith.constant 0.000000e+00 : f32
      %38 = vector.broadcast %cst_16 : f32 to vector<1x1x1xf32>
      %c0_17 = arith.constant 0 : index
      %c0_18 = arith.constant 0 : index
      %c0_19 = arith.constant 0 : index
      %39 = vector.load %arg4[%c0_17, %c0_18, %c0_19] : memref<1x1x1xf32, #tpu.memory_space<vmem>>, vector<1x1x1xf32>
      tpu.vector_store %arg4[%c0_17, %c0_18, %c0_19], %38 {strides = array<i32>} : memref<1x1x1xf32, #tpu.memory_space<vmem>>, vector<1x1x1xf32>,
    } else {
    }
    %c0 = arith.constant 0 : index
    %c0_1 = arith.constant 0 : index
    %3 = vector.load %arg2[%c0, %c0_1] : memref<8x32xf32, #tpu.memory_space<vmem>>, vector<8x32xf32>
    %cst = arith.constant dense<0xFF800000> : vector<8xf32>
    %4 = vector.multi_reduction <maximumf>, %3, %cst [1] : vector<8x32xf32> to vector<8xf32>
    %5 = vector.shape_cast %4 : vector<8xf32> to vector<8x1xf32>
    %6 = vector.broadcast %5 : vector<8x1xf32> to vector<8x32xf32>
    %7 = arith.subf %3, %6 : vector<8x32xf32>
    %8 = math.exp %7 : vector<8x32xf32>
    %cst_2 = arith.constant dense<0.000000e+00> : vector<8xf32>
    %9 = vector.multi_reduction <add>, %8, %cst_2 [1] : vector<8x32xf32> to vector<8xf32>
    %10 = vector.shape_cast %9 : vector<8xf32> to vector<8x1xf32>
    %11 = math.log %10 : vector<8x1xf32>
    %12 = arith.addf %5, %11 : vector<8x1xf32>
    %13 = tpu.iota {dimensions = array<i32: 1>} : vector<8x32xi32>
    %c0_3 = arith.constant 0 : index
    %c0_4 = arith.constant 0 : index
    %14 = vector.load %arg3[%c0_3, %c0_4] : memref<8x1xi32, #tpu.memory_space<vmem>>, vector<8x1xi32>
    %15 = vector.broadcast %14 : vector<8x1xi32> to vector<8x32xi32>
    %16 = arith.cmpi eq, %13, %15 : vector<8x32xi32>
    %cst_5 = arith.constant 0.000000e+00 : f32
    %17 = vector.broadcast %cst_5 : f32 to vector<8x32xf32>
    %18 = arith.select %16, %3, %17 : vector<8x32xi1>, vector<8x32xf32>
    %cst_6 = arith.constant dense<0.000000e+00> : vector<8xf32>
    %19 = vector.multi_reduction <add>, %18, %cst_6 [1] : vector<8x32xf32> to vector<8xf32>
    %20 = vector.shape_cast %19 : vector<8xf32> to vector<8x1xf32>
    %21 = arith.subf %12, %20 : vector<8x1xf32>
    %c1_i32 = arith.constant 1 : i32
    %22 = arith.muli %arg0, %c1_i32 : i32
    %23 = arith.addi %22, %arg1 : i32
    %c8_i32 = arith.constant 8 : i32
    %24 = arith.muli %23, %c8_i32 : i32
    %25 = tpu.iota {dimensions = array<i32: 0>} : vector<8x1xi32>
    %26 = vector.broadcast %24 : i32 to vector<8x1xi32>
    %27 = arith.addi %26, %25 : vector<8x1xi32>
    %c8_i32_7 = arith.constant 8 : i32
    %28 = vector.broadcast %c8_i32_7 : i32 to vector<8x1xi32>
    %29 = arith.cmpi slt, %27, %28 : vector<8x1xi32>
    %cst_8 = arith.constant 0.000000e+00 : f32
    %30 = vector.broadcast %cst_8 : f32 to vector<8x1xf32>
    %31 = arith.select %29, %21, %30 : vector<8x1xi1>, vector<8x1xf32>
    %cst_9 = arith.constant dense<0.000000e+00> : vector<1xf32>
    %32 = vector.multi_reduction <add>, %31, %cst_9 [0] : vector<8x1xf32> to vector<1xf32>
    %33 = vector.shape_cast %32 : vector<1xf32> to vector<1x1xf32>
    %c0_10 = arith.constant 0 : index
    %c0_11 = arith.constant 0 : index
    %c0_12 = arith.constant 0 : index
    %34 = vector.load %arg4[%c0_10, %c0_11, %c0_12] : memref<1x1x1xf32, #tpu.memory_space<vmem>>, vector<1x1x1xf32>
    %35 = vector.shape_cast %33 : vector<1x1xf32> to vector<1x1x1xf32>
    %36 = arith.addf %34, %35 : vector<1x1x1xf32>
    %c0_13 = arith.constant 0 : index
    %c0_14 = arith.constant 0 : index
    %c0_15 = arith.constant 0 : index
    %37 = vector.load %arg4[%c0_13, %c0_14, %c0_15] : memref<1x1x1xf32, #tpu.memory_space<vmem>>, vector<1x1x1xf32>
    tpu.vector_store %arg4[%c0_13, %c0_14, %c0_15], %36 {strides = array<i32>} : memref<1x1x1xf32, #tpu.memory_space<vmem>>, vector<1x1x1xf32>,
    return
  }
  func.func @transform_0(%arg0: i32, %arg1: i32) -> (i32, i32) {
    %c1_i32 = arith.constant 1 : i32
    %0 = arith.muli %arg0, %c1_i32 : i32
    %1 = arith.addi %0, %arg1 : i32
    %c0_i32 = arith.constant 0 : i32
    %c0_i32_0 = arith.constant 0 : i32
    return %1, %c0_i32 : i32, i32
  }
  func.func @transform_1(%arg0: i32, %arg1: i32) -> (i32, i32) {
    %c1_i32 = arith.constant 1 : i32
    %0 = arith.muli %arg0, %c1_i32 : i32
    %1 = arith.addi %0, %arg1 : i32
    %c0_i32 = arith.constant 0 : i32
    %c0_i32_0 = arith.constant 0 : i32
    return %1, %c0_i32 : i32, i32
  }
  func.func @transform_2(%arg0: i32, %arg1: i32) -> (i32, i32, i32) {
    %c0_i32 = arith.constant 0 : i32
    %c0_i32_0 = arith.constant 0 : i32
    %c0_i32_1 = arith.constant 0 : i32
    return %arg0, %c0_i32, %c0_i32_0 : i32, i32, i32
  }
}

</mosaic_0001>

<llo_original>
// kernel: tpu_custom_call.1
$region0: #{tpu_custom_call.1}
  #allocation0 [shape = 'u32[]', space=smem, size = 0x4, offset = 0x4, fixed_abs, tag = 'smem constant byte address 0x4 - core index']
  #allocation1 [shape = 'u32[144,128]{1,0:T(1,128)}', space=vmem, size = 0x12000, scoped, tag = 'internal scratch']
  %s0 = inlined_call_operand.vmem [shape: f32[8,32], index: 0, kind: input, shape index: {}]
  %s1 = inlined_call_operand.vmem [shape: s32[8,1], index: 1, kind: input, shape index: {}]
  %s2 = inlined_call_operand.hbm [shape: f32[1,1,1], index: 2, kind: output, shape index: {}]
  %s3 = sld [smem:[#allocation0]]
  $region22: #{tpu_custom_call.1} parent=0
    _
  %s5 = ssub.s32 1, %s3
  %s6 = scalar_select 0, %s5, %s3
  $region1: #{tpu_custom_call.1} parent=0
    #allocation2 [shape = 'u8[512]{0}', space=vmem, size = 0x400, scoped, tag = 'output window, operand 0, single buffered']
    #allocation3 [shape = 's32[1]{0}', space=sflag, size = 0x4, scoped, tag = 'scoped memory for tpu_custom_call.1']
    %7 = vsyncpa [#allocation3], 0
    // Predicated region
    $region2: #{tpu_custom_call.1} parent=1 // pred_check
      _
    $region3: #{tpu_custom_call.1} parent=1 // pred_check_branch
      %9 = sbr.rel (0) target = $region5
    $region4: #{tpu_custom_call.1} parent=1 // pred_region
      %s10 = sadd.s32 0, 0
      %p11 = scmp.lt.s32.totalorder %s10, 0
      %s12 = scalar_select %p11, %s10, 0
      %s13 = smul.addr %s12, 8
      %s14 = scalar_lea.vmem %s0, %s13
      %s15 = sadd.s32 0, 0
    $region5: #{tpu_custom_call.1} parent=1 // pred_fallthru
      _
    // Predicated region
    $region6: #{tpu_custom_call.1} parent=1 // pred_check
      _
    $region7: #{tpu_custom_call.1} parent=1 // pred_check_branch
      %17 = sbr.rel (0) target = $region9
    $region8: #{tpu_custom_call.1} parent=1 // pred_region
      %s18 = sadd.s32 0, 0
      %p19 = scmp.lt.s32.totalorder %s18, 0
      %s20 = scalar_select %p19, %s18, 0
      %s21 = smul.addr %s20, 8
      %s22 = scalar_lea.vmem %s1, %s21
      %s23 = sadd.s32 0, 0
    $region9: #{tpu_custom_call.1} parent=1 // pred_fallthru
      _
    %s24 = sadd.s32 0, 0
    %p25 = scmp.lt.s32.totalorder %s24, 0
    %s26 = scalar_select %p25, %s24, 0
    %s27 = smul.addr %s26, 8
    %s28 = scalar_lea.vmem %s0, %s27
    %s29 = sadd.s32 0, 0
    %p30 = scmp.lt.s32.totalorder %s29, 0
    %s31 = scalar_select %p30, %s29, 0
    %s32 = smul.addr %s31, 8
    %s33 = scalar_lea.vmem %s1, %s32
    %s34 = sadd.s32 0, 0
    %p35 = scmp.lt.s32.totalorder %s34, 0
    %s36 = scalar_select %p35, %s34, 0
    %s37 = smul.addr %s36, 8
    %s38 = scalar_lea.vmem %s0, %s37
    %s39 = sadd.s32 0, 0
    %s40 = sadd.s32 0, 0
    %p41 = scmp.lt.s32.totalorder %s40, 0
    %s42 = scalar_select %p41, %s40, 0
    %s43 = smul.addr %s42, 8
    %s44 = scalar_lea.vmem %s1, %s43
    %s45 = sadd.s32 0, 0
    %p46 = scmp.eq.s32.totalorder 0, 0
    // Predicated region
    $region10: #{tpu_custom_call.1} parent=1 // pred_check
      %p47 = pneg %p46
    $region11: #{tpu_custom_call.1} parent=1 // pred_check_branch
      %49 = sbr.rel (%p47) target = $region13
    $region12: #{tpu_custom_call.1} parent=1 // pred_region
      %vm50 = vcmask 0
      %51 = vst.msk [vmem:[#allocation2] sm:$0x1] %vm50, 0.0
    $region13: #{tpu_custom_call.1} parent=1 // pred_fallthru
      _
    %v52 = vld [vmem:[%s38] sm:$0xff]
    %vm53 = vcmask 261120
    %v54 = vsel %vm53, %v52, -inf
    %55 = vmax.xlane.f32.xlu0 %v54
    %v56 = vpop.xlane.xlu0 %55
    %v57 = vsub.f32 %v52, %v56
    %v58 = vmul.f32 %v57, 1.442695
    %v59 = vpow.pop %v58
    %v60 = vsel %vm53, %v59, 0.0
    %61 = vadd.xlane.f32.xlu0 %v60
    %v62 = vpop.xlane.xlu0 %61
    %v63 = vlog2.pop %v62
    %v64 = vmul.f32 %v63, 0.6931472
    %v65 = vadd.f32 %v56, %v64
    %v66 = vlaneseq
    %v67 = vand.u32 %v66, 127
    %v68 = vld [vmem:[%s44] sm:$0xff]
    %69 = vset.pattern.permute.xlu0 0
    %70 = vperm.xlu0 %69, %v68
    %v71 = vpop.permute.xlu0 %70
    %vm72 = vcmp.eq.s32.totalorder %v67, %v71
    %v73 = vsel %vm72, %v52, 0.0
    %v74 = vsel %vm53, %v73, 0.0
    %75 = vadd.xlane.f32.xlu0 %v74
    %v76 = vpop.xlane.xlu0 %75
    %v77 = vsub.f32 %v65, %v76
    %s78 = sadd.s32 0, 0
    %s79 = smul.u32 %s78, 8
    %v80 = vlaneseq
    %v81 = vshrl.u32 %v80, 7
    %v82 = vstv %s79
    %v83 = vadd.s32 %v82, %v81
    %vm84 = vcmp.lt.s32.totalorder %v83, 8
    %v85 = vsel %vm84, %v77, 0.0
    %v86 = vrot.slane %v85, 4
    %v87 = vadd.f32 %v85, %v86
    %v88 = vrot.slane %v87, 2
    %v89 = vadd.f32 %v87, %v88
    %v90 = vrot.slane %v89, 1
    %v91 = vadd.f32 %v89, %v90
    %v92 = vld [vmem:[#allocation2] sm:$0x1]
    %v93 = vadd.f32 %v92, %v91
    %vm94 = vcmask 0
    %95 = vst.msk [vmem:[#allocation2] sm:$0x1] %vm94, %v93
    // Predicated region
    $region14: #{tpu_custom_call.1} parent=1 // pred_check
      _
    $region15: #{tpu_custom_call.1} parent=1 // pred_check_branch
      %97 = sbr.rel (0) target = $region17
    $region16: #{tpu_custom_call.1} parent=1 // pred_region
      %s99 = ssub.s32 16, 16
      %100 = vsyncadd [#allocation3], %s99
      %s102 = sshll.u32 [#allocation2], 4
      %s103 = int_to_ptr.vmem [resolvable:$true] %s102
      %105 = dma.vmem_to_hbm [thread:$0]  %s103, 16, %s2, [#allocation3]
    $region17: #{tpu_custom_call.1} parent=1 // pred_fallthru
      _
    // Predicated region
    $region18: #{tpu_custom_call.1} parent=1 // pred_check
      _
    $region19: #{tpu_custom_call.1} parent=1 // pred_check_branch
      %107 = sbr.rel (0) target = $region21
    $region20: #{tpu_custom_call.1} parent=1 // pred_region
      %108 = dma.done [#allocation3], 16
    $region21: #{tpu_custom_call.1} parent=1 // pred_fallthru
      _
    %109 = vsyncpa [#allocation3], 1

</llo_original>
